<compile_context>
chip_gen: v7x
topology: tpu7x:2x2x1
jax: 0.10.0
libtpu: 0.0.40
codegen_flags: <defaults>
</compile_context>

<pallas_src>
import functools

import jax
import jax.numpy as jnp
from jax.experimental import pallas as pl
from jax.experimental.pallas import tpu as pltpu


def _swish_kernel(x_ref, o_ref, *, compute_dtype):
    x = x_ref[...].astype(compute_dtype)
    # sigmoid(x) = 1 / (1 + exp(-x)); exp goes to the EUP slot.  Exact
    # reciprocal (VALU Newton-Raphson) is free filler in this HBM-bound
    # kernel and keeps results within 1e-6 of jax.nn.sigmoid.
    sig = pl.reciprocal(1.0 + jnp.exp(-x))
    o_ref[...] = (x * sig).astype(o_ref.dtype)


def _device_kind():
    try:
        return jax.devices()[0].device_kind.lower()
    except Exception:
        return ""


def _default_tile_bytes():
    # v7x: bigger tiles amortize the ~0.35us per-grid-step cost against its
    # 3.2 TB/s HBM; 4 buffers x 4 MiB stays well under the 32 MiB scoped
    # VMEM default.  Elsewhere 2 MiB (safe under v5e's 16 MiB default).
    return (4 * 1024 * 1024) if "v7" in _device_kind() else (2 * 1024 * 1024)


def _compute_dtype(dtype):
    kind = _device_kind()
    if jnp.dtype(dtype) == jnp.bfloat16 and ("v6" in kind or "v7" in kind):
        return jnp.bfloat16  # v6e/v7x VPU + EUP are bf16-native
    return jnp.float32       # v5e (no bf16 VPU/EUP) and everything else


def _sublane_multiple(itemsize):
    # Packed dtypes need the second-to-last block dim to be a multiple of the
    # packing factor: 8 for 4-byte, 16 for 2-byte, 32 for 1-byte elements.
    return max(8, 32 // max(1, itemsize))


def _choose_cols(n):
    """Widest lane-dense column count that divides n exactly (None if ragged)."""
    for c in (1024, 512, 256, 128):
        if n % c == 0:
            return c
    return None


def _min_blocks(total_bytes, leading_extent, split_unit):
    if total_bytes >= 512 * 1024:
        return 4  # enough grid steps for real prefetch/writeback overlap
    if leading_extent >= 2 * split_unit:
        return 2  # keep both v7x TensorCores busy on small-but-splittable inputs
    return 1


def _choose_block_rows(rows, cols, itemsize, tile_bytes, sub):
    total_bytes = rows * cols * itemsize
    tile_rows = max(sub, (tile_bytes // (cols * itemsize)) // sub * sub)
    blocks = _min_blocks(total_bytes, rows, sub)
    per_block = pl.cdiv(pl.cdiv(rows, blocks), sub) * sub
    block_rows = max(sub, min(tile_rows, per_block))
    if block_rows >= rows:
        block_rows = rows  # whole-dim block is always a legal block shape
    return block_rows


def swish(x, *, target_tile_bytes=None, donate=False):
    """Elementwise swish: x * sigmoid(x). Works for any shape/dtype."""
    orig_shape, orig_dtype = x.shape, x.dtype
    n = x.size
    if n == 0:
        return x

    itemsize = jnp.dtype(orig_dtype).itemsize
    tile_bytes = target_tile_bytes or _default_tile_bytes()
    sub = _sublane_multiple(itemsize)
    kernel = functools.partial(_swish_kernel,
                               compute_dtype=_compute_dtype(orig_dtype))
    cost = pl.CostEstimate(flops=4 * n, transcendentals=n,
                           bytes_accessed=2 * n * itemsize)
    cparams = pltpu.CompilerParams(dimension_semantics=("parallel",))
    aliases = {0: 0} if donate else {}

    cols = _choose_cols(n)
    if cols is not None:
        # Common case: flattened size divides a lane-dense column count.
        rows = n // cols
        x2d = jnp.reshape(x, (rows, cols))  # metadata-only, no HBM copy
        block_rows = _choose_block_rows(rows, cols, itemsize, tile_bytes, sub)
        grid = (pl.cdiv(rows, block_rows),)
        out = pl.pallas_call(
            kernel,
            out_shape=jax.ShapeDtypeStruct((rows, cols), orig_dtype),
            grid_spec=pltpu.PrefetchScalarGridSpec(
                num_scalar_prefetch=0,
                grid=grid,
                in_specs=[pl.BlockSpec((block_rows, cols), lambda i: (i, 0))],
                out_specs=pl.BlockSpec((block_rows, cols), lambda i: (i, 0)),
            ),
            compiler_params=cparams,
            cost_estimate=cost,
            input_output_aliases=aliases,
        )(x2d)
        return out.reshape(orig_shape)

    # Ragged flattened size (n % 128 != 0): run on the flat 1D view with a
    # 128-multiple block.  Pallas masks the partial tail block (padded reads
    # are never written back), so there is no pad/slice HBM round trip.
    xflat = jnp.reshape(x, (n,))
    max_elems = max(1024, (tile_bytes // itemsize) // 1024 * 1024)
    blocks = _min_blocks(n * itemsize, n, 1024)
    per_block = pl.cdiv(pl.cdiv(n, blocks), 1024) * 1024
    block_n = max(128, min(max_elems, per_block))
    block_n = min(block_n, pl.cdiv(n, 128) * 128)
    grid = (pl.cdiv(n, block_n),)
    out = pl.pallas_call(
        kernel,
        out_shape=jax.ShapeDtypeStruct((n,), orig_dtype),
        grid_spec=pltpu.PrefetchScalarGridSpec(
            num_scalar_prefetch=0,
            grid=grid,
            in_specs=[pl.BlockSpec((block_n,), lambda i: (i,))],
            out_specs=pl.BlockSpec((block_n,), lambda i: (i,)),
        ),
        compiler_params=cparams,
        cost_estimate=cost,
        input_output_aliases=aliases,
    )(xflat)
    return out.reshape(orig_shape)


if __name__ == "__main__":
    key = jax.random.PRNGKey(0)
    x = jax.random.normal(key, (2, 4, 16, 16), dtype=jnp.float32)

    y = swish(x)
    jax.block_until_ready(y)

    # Reference check (plain JAX).
    y_ref = x * jax.nn.sigmoid(x)
    assert y.shape == x.shape and y.dtype == x.dtype
    assert jnp.allclose(y, y_ref, atol=1e-6, rtol=1e-6)

    print("KERNEL_OK")
</pallas_src>

<mosaic_0001>
module attributes {stable_mosaic.version = 11 : i64} {
  func.func @_swish_kernel(%arg0: i32, %arg1: memref<2x1024xf32, #tpu.memory_space<vmem>>, %arg2: memref<2x1024xf32, #tpu.memory_space<vmem>>) attributes {dimension_semantics = [#tpu.dimension_semantics<parallel>], iteration_bounds = array<i64: 1>, scalar_prefetch = 0 : i64, scratch_operands = 0 : i64, tpu.core_type = #tpu.core_type<tc>, window_params = [{transform_indices = @transform_0, window_bounds = array<i64: 2, 1024>}, {transform_indices = @transform_1, window_bounds = array<i64: 2, 1024>}]} {
    %c0 = arith.constant 0 : index
    %c0_0 = arith.constant 0 : index
    %0 = vector.load %arg1[%c0, %c0_0] : memref<2x1024xf32, #tpu.memory_space<vmem>>, vector<2x1024xf32>
    %cst = arith.constant 0.000000e+00 : f32
    %1 = vector.broadcast %cst : f32 to vector<2x1024xf32>
    %2 = arith.subf %1, %0 : vector<2x1024xf32>
    %3 = math.exp %2 : vector<2x1024xf32>
    %cst_1 = arith.constant 1.000000e+00 : f32
    %4 = vector.broadcast %cst_1 : f32 to vector<2x1024xf32>
    %5 = arith.addf %4, %3 : vector<2x1024xf32>
    %6 = tpu.reciprocal %5 : vector<2x1024xf32> -> vector<2x1024xf32>
    %7 = arith.mulf %0, %6 : vector<2x1024xf32>
    %c0_2 = arith.constant 0 : index
    %c0_3 = arith.constant 0 : index
    %8 = vector.load %arg2[%c0_2, %c0_3] : memref<2x1024xf32, #tpu.memory_space<vmem>>, vector<2x1024xf32>
    tpu.vector_store %arg2[%c0_2, %c0_3], %7 {strides = array<i32>} : memref<2x1024xf32, #tpu.memory_space<vmem>>, vector<2x1024xf32>,
    return
  }
  func.func @transform_0(%arg0: i32) -> (i32, i32) {
    %c0_i32 = arith.constant 0 : i32
    %c0_i32_0 = arith.constant 0 : i32
    return %arg0, %c0_i32 : i32, i32
  }
  func.func @transform_1(%arg0: i32) -> (i32, i32) {
    %c0_i32 = arith.constant 0 : i32
    %c0_i32_0 = arith.constant 0 : i32
    return %arg0, %c0_i32 : i32, i32
  }
}

</mosaic_0001>

<llo_original>
// kernel: tpu_custom_call.1
$region0: #{tpu_custom_call.1}
  #allocation0 [shape = 'u32[]', space=smem, size = 0x4, offset = 0x4, fixed_abs, tag = 'smem constant byte address 0x4 - core index']
  #allocation1 [shape = 'u32[144,128]{1,0:T(1,128)}', space=vmem, size = 0x12000, scoped, tag = 'internal scratch']
  %s0 = inlined_call_operand.hbm [shape: f32[2,1024], index: 0, kind: input, shape index: {}]
  %s1 = inlined_call_operand.hbm [shape: f32[2,1024], index: 1, kind: output, shape index: {}]
  %s2 = sld [smem:[#allocation0]]
  $region18: #{tpu_custom_call.1} parent=0
    _
  %s4 = ssub.s32 1, %s2
  %s5 = scalar_select 0, %s4, %s2
  $region1: #{tpu_custom_call.1} parent=0
    #allocation2 [shape = 'u8[8192]{0}', space=vmem, size = 0x2000, scoped, tag = 'input window, operand 0, single buffered']
    #allocation3 [shape = 's32[1]{0}', space=sflag, size = 0x4, scoped, tag = 'scoped memory for tpu_custom_call.1']
    #allocation4 [shape = 's32[1]{0}', space=sflag, size = 0x4, scoped, tag = 'scoped memory for tpu_custom_call.1']
    #allocation5 [shape = 'u8[8192]{0}', space=vmem, size = 0x2000, scoped, tag = 'output window, operand 0, single buffered']
    %6 = vsyncpa [#allocation3], 0
    %7 = vsyncpa [#allocation4], 0
    // Predicated region
    $region2: #{tpu_custom_call.1} parent=1 // pred_check
      _
    $region3: #{tpu_custom_call.1} parent=1 // pred_check_branch
      %9 = sbr.rel (0) target = $region5
    $region4: #{tpu_custom_call.1} parent=1 // pred_region
      %s11 = ssub.s32 256, 256
      %12 = vsyncadd [#allocation3], %s11
      %s14 = sshll.u32 [#allocation2], 4
      %s15 = int_to_ptr.vmem [resolvable:$true] %s14
      %17 = dma.hbm_to_vmem [thread:$0]  %s0, 256, %s15, [#allocation3]
    $region5: #{tpu_custom_call.1} parent=1 // pred_fallthru
      _
    // Predicated region
    $region6: #{tpu_custom_call.1} parent=1 // pred_check
      _
    $region7: #{tpu_custom_call.1} parent=1 // pred_check_branch
      %19 = sbr.rel (0) target = $region9
    $region8: #{tpu_custom_call.1} parent=1 // pred_region
      %20 = dma.done [#allocation3], 256
    $region9: #{tpu_custom_call.1} parent=1 // pred_fallthru
      _
    %v21 = vld [vmem:[#allocation2] sm:$0xff]
    %v22 = vld [vmem:[#allocation2 + $0x8] sm:$0xff]
    %v23 = vsub.f32 0.0, %v21
    %v24 = vsub.f32 0.0, %v22
    %v25 = vmul.f32 %v23, 1.442695
    %v26 = vpow.pop %v25
    %v27 = vmul.f32 %v24, 1.442695
    %v28 = vpow.pop %v27
    %v29 = vadd.f32 %v26, 1.0
    %v30 = vadd.f32 %v28, 1.0
    %v31 = vrcp.pop %v29
    %v32 = vrcp.pop %v30
    %v33 = vmul.f32 %v21, %v31
    %v34 = vmul.f32 %v22, %v32
    %35 = vst [vmem:[#allocation5] sm:$0xff] %v33
    %36 = vst [vmem:[#allocation5 + $0x8] sm:$0xff] %v34
    // Predicated region
    $region10: #{tpu_custom_call.1} parent=1 // pred_check
      _
    $region11: #{tpu_custom_call.1} parent=1 // pred_check_branch
      %38 = sbr.rel (0) target = $region13
    $region12: #{tpu_custom_call.1} parent=1 // pred_region
      %s40 = ssub.s32 256, 256
      %41 = vsyncadd [#allocation4], %s40
      %s43 = sshll.u32 [#allocation5], 4
      %s44 = int_to_ptr.vmem [resolvable:$true] %s43
      %46 = dma.vmem_to_hbm [thread:$0]  %s44, 256, %s1, [#allocation4]
    $region13: #{tpu_custom_call.1} parent=1 // pred_fallthru
      _
    // Predicated region
    $region14: #{tpu_custom_call.1} parent=1 // pred_check
      _
    $region15: #{tpu_custom_call.1} parent=1 // pred_check_branch
      %48 = sbr.rel (0) target = $region17
    $region16: #{tpu_custom_call.1} parent=1 // pred_region
      %49 = dma.done [#allocation4], 256
    $region17: #{tpu_custom_call.1} parent=1 // pred_fallthru
      _
    %50 = vsyncpa [#allocation3], 1
    %51 = vsyncpa [#allocation4], 1

</llo_original>
